<compile_context>
chip_gen: v7x
topology: tpu7x:2x2x1
jax: 0.10.0
libtpu: 0.0.40
codegen_flags: <defaults>
</compile_context>

<pallas_src>
import functools

import jax
import jax.numpy as jnp
from jax.experimental import pallas as pl
from jax.experimental.pallas import tpu as pltpu


_VMEM_LIMIT = 48 * 1024 * 1024  # stay safely under v7x's 64 MiB/TC physical VMEM


def _round_up(a, b):
    return (a + b - 1) // b * b


def _selu(v):
    alpha = 1.6732632423543772
    scale = 1.0507009873554805
    return scale * jnp.where(v > 0, v, alpha * (jnp.exp(v) - 1.0))


# ----------------------------- GraphConvolution layer -----------------------------

def _gc_kernel(adj_ref, h_ref, w_ref, b_ref, out_ref, *, compute_dtype):
    # relu((adj_tile @ h) @ W + b)  -- contracts the NxN matmul against the narrow
    # input-feature axis (re-association), accumulate in f32 on the MXU.
    ah = jnp.dot(adj_ref[...], h_ref[...], preferred_element_type=jnp.float32)
    hw = jnp.dot(ah.astype(compute_dtype), w_ref[...],
                 preferred_element_type=jnp.float32)
    out_ref[...] = jnp.maximum(hw + b_ref[...], 0.0).astype(out_ref.dtype)


def _gc_layer(adj, h, w, b, *, tile_n, compute_dtype):
    n_pad = adj.shape[0]
    fin, fout = w.shape
    num_tiles = n_pad // tile_n
    return pl.pallas_call(
        functools.partial(_gc_kernel, compute_dtype=compute_dtype),
        out_shape=jax.ShapeDtypeStruct((n_pad, fout), compute_dtype),
        grid_spec=pltpu.PrefetchScalarGridSpec(
            num_scalar_prefetch=0,
            grid=(num_tiles,),
            in_specs=[
                pl.BlockSpec((tile_n, n_pad), lambda i: (i, 0)),   # adj row tile
                pl.BlockSpec((n_pad, fin), lambda i: (0, 0)),      # node features (full)
                pl.BlockSpec((fin, fout), lambda i: (0, 0)),       # weight
                pl.BlockSpec((1, fout), lambda i: (0, 0)),         # bias
            ],
            out_specs=pl.BlockSpec((tile_n, fout), lambda i: (i, 0)),
        ),
        compiler_params=pltpu.CompilerParams(
            dimension_semantics=("parallel",),                     # megacore on v7x
            vmem_limit_bytes=_VMEM_LIMIT),
    )(adj, h, w, b)


# ------------------------ global-mean-pool + fc1 + attention ------------------------

def _pool_fusion_kernel(h2_ref, sub_ref, wfc_ref, bfc_ref,
                        wg_ref, we_ref, bz_ref, e_ref, r_ref,
                        out_ref, acc_ref, *, n_true, n_pad, tile_n, nheads):
    i = pl.program_id(0)

    @pl.when(i == 0)
    def _():
        acc_ref[...] = jnp.zeros_like(acc_ref)

    h2 = h2_ref[...].astype(jnp.float32)
    if n_pad != n_true:  # trace-time constant: mask zero-padded node rows out of the pool
        row = i * tile_n + jax.lax.broadcasted_iota(jnp.int32, h2.shape, 0)
        h2 = jnp.where(row < n_true, h2, 0.0)
    acc_ref[...] += jnp.sum(h2, axis=0, keepdims=True)

    @pl.when(i == pl.num_programs(0) - 1)
    def _():
        pooled = _selu(acc_ref[...] * (1.0 / n_true))              # [1, 2*nhid]
        # dropout: inference (training=False) -> identity.
        xext = (jnp.dot(sub_ref[...], wfc_ref[...],
                        preferred_element_type=jnp.float32)
                + bfc_ref[...])                                    # [1, nhid]
        # one fused matmul pair: [attention gate | all head projections], concat of
        # [pooled | xext] folded into split weight matrices.
        z = (jnp.dot(pooled, wg_ref[...], preferred_element_type=jnp.float32)
             + jnp.dot(xext, we_ref[...], preferred_element_type=jnp.float32)
             + bz_ref[...])                                        # [1, nheads + nheads*nclass]
        att_logits = z[:, :nheads]                                 # [1, nheads]
        heads_flat = z[:, nheads:]                                 # [1, nheads*nclass]
        m = jnp.max(att_logits, axis=1, keepdims=True)
        ea = jnp.exp(att_logits - m)
        att = ea / jnp.sum(ea, axis=1, keepdims=True)              # softmax over heads
        # att-weighted sum over heads via fixed expand (E) / reduce (R) matrices:
        att_rep = jnp.dot(att, e_ref[...], preferred_element_type=jnp.float32)
        logits = jnp.dot(att_rep * heads_flat, r_ref[...],
                         preferred_element_type=jnp.float32)       # [1, nclass]
        lm = jnp.max(logits, axis=1, keepdims=True)
        sh = logits - lm
        out_ref[...] = sh - jnp.log(jnp.sum(jnp.exp(sh), axis=1, keepdims=True))


def _pool_fusion(h2, sub_fea, wfc, bfc, wg, we, bz, emat, rmat, *,
                 n_true, n_pad, tile_n, nheads, nclass):
    num_tiles = n_pad // tile_n
    two_nhid = h2.shape[1]
    kern = functools.partial(_pool_fusion_kernel, n_true=n_true, n_pad=n_pad,
                             tile_n=tile_n, nheads=nheads)

    def cfull(shape):
        return pl.BlockSpec(shape, lambda i: (0, 0))

    return pl.pallas_call(
        kern,
        out_shape=jax.ShapeDtypeStruct((1, nclass), jnp.float32),
        grid_spec=pltpu.PrefetchScalarGridSpec(
            num_scalar_prefetch=0,
            grid=(num_tiles,),
            in_specs=[
                pl.BlockSpec((tile_n, two_nhid), lambda i: (i, 0)),  # h2 row tile
                cfull(sub_fea.shape), cfull(wfc.shape), cfull(bfc.shape),
                cfull(wg.shape), cfull(we.shape), cfull(bz.shape),
                cfull(emat.shape), cfull(rmat.shape),
            ],
            out_specs=pl.BlockSpec((1, nclass), lambda i: (0, 0)),
            scratch_shapes=[pltpu.VMEM((1, two_nhid), jnp.float32)],
        ),
        compiler_params=pltpu.CompilerParams(
            dimension_semantics=("arbitrary",),                     # cross-tile reduction
            vmem_limit_bytes=_VMEM_LIMIT),
    )(h2, sub_fea, wfc, bfc, wg, we, bz, emat, rmat)


# ----------------------------------- forward ---------------------------------------

def gcn_fusion8_forward(x, adj, sub_fea, params, *, matmul_dtype=jnp.float32):
    n_true = x.shape[0]
    nhid = params["w1"].shape[1]
    nheads, _, nclass = params["headw_g"].shape

    # node-row tiling; pad N so the grid divides evenly (padded adj rows/cols are zero).
    if n_true <= 512:
        tile_n = _round_up(n_true, 8)
    else:
        tile_n = 512
    n_pad = _round_up(n_true, tile_n)
    if n_pad != n_true:
        pad = n_pad - n_true
        adj = jnp.pad(adj, ((0, pad), (0, pad)))
        x = jnp.pad(x, ((0, pad), (0, 0)))

    cd = matmul_dtype                        # bf16 MXU inputs on v6e/v7x; f32 accumulate always
    adj_c = adj.astype(cd)
    h1 = _gc_layer(adj_c, x.astype(cd), params["w1"].astype(cd),
                   params["b1"].astype(jnp.float32), tile_n=tile_n, compute_dtype=cd)
    h2 = _gc_layer(adj_c, h1, params["w2"].astype(cd),
                   params["b2"].astype(jnp.float32), tile_n=tile_n, compute_dtype=cd)

    # host-side fusion of attention weights: [gate | stacked heads], concat folded in.
    headw_g = jnp.transpose(params["headw_g"], (1, 0, 2)).reshape(2 * nhid, nheads * nclass)
    headw_e = jnp.transpose(params["headw_e"], (1, 0, 2)).reshape(nhid, nheads * nclass)
    headb = jnp.transpose(params["headb"], (1, 0, 2)).reshape(1, nheads * nclass)
    wg = jnp.concatenate([params["attw_g"], headw_g], axis=1).astype(jnp.float32)
    we = jnp.concatenate([params["attw_e"], headw_e], axis=1).astype(jnp.float32)
    bz = jnp.concatenate([params["attb"], headb], axis=1).astype(jnp.float32)
    # E repeats each head weight across its nclass columns; R sums the per-head blocks.
    emat = jnp.repeat(jnp.eye(nheads, dtype=jnp.float32), nclass, axis=1)   # [H, H*C]
    rmat = jnp.tile(jnp.eye(nclass, dtype=jnp.float32), (nheads, 1))        # [H*C, C]

    return _pool_fusion(h2, sub_fea.astype(jnp.float32),
                        params["wfc"].astype(jnp.float32),
                        params["bfc"].astype(jnp.float32),
                        wg, we, bz, emat, rmat,
                        n_true=n_true, n_pad=n_pad, tile_n=tile_n,
                        nheads=nheads, nclass=nclass)


# ---------------------------------- reference ---------------------------------------

def gcn_fusion8_reference(x, adj, sub_fea, params):
    """Pure-JAX reference (original associativity / per-head loop)."""
    h = jnp.maximum(adj @ (x @ params["w1"]) + params["b1"], 0.0)
    h = jnp.maximum(adj @ (h @ params["w2"]) + params["b2"], 0.0)
    pooled = _selu(jnp.mean(h, axis=0, keepdims=True))
    xext = sub_fea @ params["wfc"] + params["bfc"]
    feat_att = pooled @ params["attw_g"] + xext @ params["attw_e"] + params["attb"]
    att = jax.nn.softmax(feat_att, axis=1)
    logits = 0.0
    for hd in range(params["headw_g"].shape[0]):
        o = pooled @ params["headw_g"][hd] + xext @ params["headw_e"][hd] + params["headb"][hd]
        logits = logits + att[:, hd:hd + 1] * o
    return jax.nn.log_softmax(logits, axis=1)


def make_params(key, nfeat, nfeat_ext, nhid, nclass, nheads):
    ks = jax.random.split(key, 12)
    s = 0.1
    return {
        "w1": s * jax.random.normal(ks[0], (nfeat, nhid), jnp.float32),
        "b1": s * jax.random.normal(ks[1], (1, nhid), jnp.float32),
        "w2": s * jax.random.normal(ks[2], (nhid, 2 * nhid), jnp.float32),
        "b2": s * jax.random.normal(ks[3], (1, 2 * nhid), jnp.float32),
        "wfc": s * jax.random.normal(ks[4], (nfeat_ext, nhid), jnp.float32),
        "bfc": s * jax.random.normal(ks[5], (1, nhid), jnp.float32),
        "attw_g": s * jax.random.normal(ks[6], (2 * nhid, nheads), jnp.float32),
        "attw_e": s * jax.random.normal(ks[7], (nhid, nheads), jnp.float32),
        "attb": s * jax.random.normal(ks[8], (1, nheads), jnp.float32),
        "headw_g": s * jax.random.normal(ks[9], (nheads, 2 * nhid, nclass), jnp.float32),
        "headw_e": s * jax.random.normal(ks[10], (nheads, nhid, nclass), jnp.float32),
        "headb": s * jax.random.normal(ks[11], (nheads, 1, nclass), jnp.float32),
    }


if __name__ == "__main__":
    N, nfeat, nfeat_ext, nhid, nclass, nheads = 16, 8, 8, 32, 4, 2
    key = jax.random.PRNGKey(0)
    k_x, k_a, k_s, k_p = jax.random.split(key, 4)

    x = jax.random.normal(k_x, (N, nfeat), jnp.float32)
    a = jnp.abs(jax.random.normal(k_a, (N, N), jnp.float32))
    adj = a + a.T + jnp.eye(N, dtype=jnp.float32)
    adj = adj / jnp.sum(adj, axis=1, keepdims=True)
    sub_fea = jax.random.normal(k_s, (1, nfeat_ext), jnp.float32)
    params = make_params(k_p, nfeat, nfeat_ext, nhid, nclass, nheads)

    ref = gcn_fusion8_reference(x, adj, sub_fea, params)

    # f32 path, single-tile grid (strict check)
    out = jax.block_until_ready(gcn_fusion8_forward(x, adj, sub_fea, params))
    assert out.shape == (1, nclass)
    assert jnp.allclose(out, ref, atol=1e-4, rtol=1e-4), (out, ref)

    # multi-tile + padded path (N=600 -> 512-row tiles, padded to 1024, masked pooling)
    N2 = 600
    k2x, k2a = jax.random.split(jax.random.PRNGKey(1), 2)
    x2 = jax.random.normal(k2x, (N2, nfeat), jnp.float32)
    a2 = jnp.abs(jax.random.normal(k2a, (N2, N2), jnp.float32))
    adj2 = a2 + a2.T + jnp.eye(N2, dtype=jnp.float32)
    adj2 = adj2 / jnp.sum(adj2, axis=1, keepdims=True)
    out2 = jax.block_until_ready(gcn_fusion8_forward(x2, adj2, sub_fea, params))
    ref2 = gcn_fusion8_reference(x2, adj2, sub_fea, params)
    assert jnp.allclose(out2, ref2, atol=1e-4, rtol=1e-4), (out2, ref2)

    # bf16 MXU-input path (f32 accumulation) — loose tolerance per reduced-precision inputs
    out_bf = jax.block_until_ready(
        gcn_fusion8_forward(x, adj, sub_fea, params, matmul_dtype=jnp.bfloat16))
    assert jnp.allclose(out_bf, ref, atol=5e-2, rtol=5e-2), (out_bf, ref)

    print("KERNEL_OK")
</pallas_src>

<mosaic_0001>
module attributes {stable_mosaic.version = 11 : i64} {
  func.func @_gc_kernel(%arg0: i32, %arg1: memref<16x16xf32, #tpu.memory_space<vmem>>, %arg2: memref<16x8xf32, #tpu.memory_space<vmem>>, %arg3: memref<8x32xf32, #tpu.memory_space<vmem>>, %arg4: memref<1x32xf32, #tpu.memory_space<vmem>>, %arg5: memref<16x32xf32, #tpu.memory_space<vmem>>) attributes {dimension_semantics = [#tpu.dimension_semantics<parallel>], iteration_bounds = array<i64: 1>, scalar_prefetch = 0 : i64, scratch_operands = 0 : i64, tpu.core_type = #tpu.core_type<tc>, window_params = [{transform_indices = @transform_0, window_bounds = array<i64: 16, 16>}, {pipeline_mode = #tpu.pipeline_mode<synchronous>, transform_indices = @transform_1, window_bounds = array<i64: 16, 8>}, {pipeline_mode = #tpu.pipeline_mode<synchronous>, transform_indices = @transform_2, window_bounds = array<i64: 8, 32>}, {pipeline_mode = #tpu.pipeline_mode<synchronous>, transform_indices = @transform_3, window_bounds = array<i64: 1, 32>}, {transform_indices = @transform_4, window_bounds = array<i64: 16, 32>}]} {
    %c0 = arith.constant 0 : index
    %c0_0 = arith.constant 0 : index
    %0 = vector.load %arg1[%c0, %c0_0] : memref<16x16xf32, #tpu.memory_space<vmem>>, vector<16x16xf32>
    %c0_1 = arith.constant 0 : index
    %c0_2 = arith.constant 0 : index
    %1 = vector.load %arg2[%c0_1, %c0_2] : memref<16x8xf32, #tpu.memory_space<vmem>>, vector<16x8xf32>
    %cst = arith.constant dense<0.000000e+00> : vector<16x8xf32>
    %2 = tpu.matmul %0, %1, %cst {dimension_numbers = #tpu.dot_dimension_numbers<[1], [0], [0], [1], [0, 0, 1, 1], [], []>} : vector<16x16xf32>, vector<16x8xf32>, vector<16x8xf32> -> vector<16x8xf32>
    %c0_3 = arith.constant 0 : index
    %c0_4 = arith.constant 0 : index
    %3 = vector.load %arg3[%c0_3, %c0_4] : memref<8x32xf32, #tpu.memory_space<vmem>>, vector<8x32xf32>
    %cst_5 = arith.constant dense<0.000000e+00> : vector<16x32xf32>
    %4 = tpu.matmul %2, %3, %cst_5 {dimension_numbers = #tpu.dot_dimension_numbers<[1], [0], [0], [1], [0, 0, 1, 1], [], []>} : vector<16x8xf32>, vector<8x32xf32>, vector<16x32xf32> -> vector<16x32xf32>
    %c0_6 = arith.constant 0 : index
    %c0_7 = arith.constant 0 : index
    %5 = vector.load %arg4[%c0_6, %c0_7] : memref<1x32xf32, #tpu.memory_space<vmem>>, vector<1x32xf32>
    %6 = vector.broadcast %5 : vector<1x32xf32> to vector<16x32xf32>
    %7 = arith.addf %4, %6 : vector<16x32xf32>
    %cst_8 = arith.constant 0.000000e+00 : f32
    %8 = vector.broadcast %cst_8 : f32 to vector<16x32xf32>
    %9 = arith.maximumf %7, %8 : vector<16x32xf32>
    %c0_9 = arith.constant 0 : index
    %c0_10 = arith.constant 0 : index
    %10 = vector.load %arg5[%c0_9, %c0_10] : memref<16x32xf32, #tpu.memory_space<vmem>>, vector<16x32xf32>
    tpu.vector_store %arg5[%c0_9, %c0_10], %9 {strides = array<i32>} : memref<16x32xf32, #tpu.memory_space<vmem>>, vector<16x32xf32>,
    return
  }
  func.func @transform_0(%arg0: i32) -> (i32, i32) {
    %c0_i32 = arith.constant 0 : i32
    %c0_i32_0 = arith.constant 0 : i32
    return %arg0, %c0_i32 : i32, i32
  }
  func.func @transform_1(%arg0: i32) -> (i32, i32) {
    %c0_i32 = arith.constant 0 : i32
    %c0_i32_0 = arith.constant 0 : i32
    %c0_i32_1 = arith.constant 0 : i32
    return %c0_i32, %c0_i32_0 : i32, i32
  }
  func.func @transform_2(%arg0: i32) -> (i32, i32) {
    %c0_i32 = arith.constant 0 : i32
    %c0_i32_0 = arith.constant 0 : i32
    %c0_i32_1 = arith.constant 0 : i32
    return %c0_i32, %c0_i32_0 : i32, i32
  }
  func.func @transform_3(%arg0: i32) -> (i32, i32) {
    %c0_i32 = arith.constant 0 : i32
    %c0_i32_0 = arith.constant 0 : i32
    %c0_i32_1 = arith.constant 0 : i32
    return %c0_i32, %c0_i32_0 : i32, i32
  }
  func.func @transform_4(%arg0: i32) -> (i32, i32) {
    %c0_i32 = arith.constant 0 : i32
    %c0_i32_0 = arith.constant 0 : i32
    return %arg0, %c0_i32 : i32, i32
  }
}

</mosaic_0001>

<llo_original>
// kernel: tpu_custom_call.1
$region0: #{tpu_custom_call.1}
  #allocation0 [shape = 'u32[]', space=smem, size = 0x4, offset = 0x4, fixed_abs, tag = 'smem constant byte address 0x4 - core index']
  #allocation1 [shape = 'u32[144,128]{1,0:T(1,128)}', space=vmem, size = 0x12000, scoped, tag = 'internal scratch']
  %s0 = inlined_call_operand.vmem [shape: f32[16,16], index: 0, kind: input, shape index: {}]
  %s1 = inlined_call_operand.vmem [shape: f32[16,8], index: 1, kind: input, shape index: {}]
  %s2 = inlined_call_operand.vmem [shape: f32[8,32], index: 2, kind: input, shape index: {}]
  %s3 = inlined_call_operand.vmem [shape: f32[1,32], index: 3, kind: input, shape index: {}]
  %s4 = inlined_call_operand.hbm [shape: f32[16,32], index: 4, kind: output, shape index: {}]
  %s5 = sld [smem:[#allocation0]]
  $region26: #{tpu_custom_call.1} parent=0
    _
  %s7 = ssub.s32 1, %s5
  %s8 = scalar_select 0, %s7, %s5
  $region1: #{tpu_custom_call.1} parent=0
    #allocation2 [shape = 'u8[8192]{0}', space=vmem, size = 0x2000, scoped, tag = 'output window, operand 0, single buffered']
    #allocation3 [shape = 's32[1]{0}', space=sflag, size = 0x4, scoped, tag = 'scoped memory for tpu_custom_call.1']
    %9 = vsyncpa [#allocation3], 0
    // Predicated region
    $region2: #{tpu_custom_call.1} parent=1 // pred_check
      _
    $region3: #{tpu_custom_call.1} parent=1 // pred_check_branch
      %11 = sbr.rel (0) target = $region5
    $region4: #{tpu_custom_call.1} parent=1 // pred_region
      _
    $region5: #{tpu_custom_call.1} parent=1 // pred_fallthru
      _
    // Predicated region
    $region6: #{tpu_custom_call.1} parent=1 // pred_check
      _
    $region7: #{tpu_custom_call.1} parent=1 // pred_check_branch
      %13 = sbr.rel (0) target = $region9
    $region8: #{tpu_custom_call.1} parent=1 // pred_region
      _
    $region9: #{tpu_custom_call.1} parent=1 // pred_fallthru
      _
    // Predicated region
    $region10: #{tpu_custom_call.1} parent=1 // pred_check
      _
    $region11: #{tpu_custom_call.1} parent=1 // pred_check_branch
      %15 = sbr.rel (0) target = $region13
    $region12: #{tpu_custom_call.1} parent=1 // pred_region
      _
    $region13: #{tpu_custom_call.1} parent=1 // pred_fallthru
      _
    // Predicated region
    $region14: #{tpu_custom_call.1} parent=1 // pred_check
      _
    $region15: #{tpu_custom_call.1} parent=1 // pred_check_branch
      %17 = sbr.rel (0) target = $region17
    $region16: #{tpu_custom_call.1} parent=1 // pred_region
      _
    $region17: #{tpu_custom_call.1} parent=1 // pred_fallthru
      _
    %v18 = vld [vmem:[%s0] sm:$0xff]
    %v19 = vld [vmem:[%s0 + $0x8] sm:$0xff]
    %v20 = vld [vmem:[%s1] sm:$0xff]
    %v21 = vld [vmem:[%s1 + $0x8] sm:$0xff]
    %vm22 = vcmask 130048
    %v24 = vsel %vm22, %v18, 0
    %v27 = vsel %vm22, %v19, 0
    %29 = vmatprep.subr.mxu0 0.0
    %30 = vmatpush1.msra.mxu0 %v20
    %31 = vmatprep.subr.mxu0 0.0
    %32 = vmatpush1.msra.mxu0 %v21
    %33 = vmatprep.subr.mxu0 0.0
    %34 = vmatpush1.msra.mxu0 0.0
    %35 = vmatprep.subr.mxu0 0.0
    %36 = vmatpush1.msra.mxu0 0.0
    %37 = vmatprep.subr.mxu0 0.0
    %38 = vmatpush1.msra.mxu0 0.0
    %39 = vmatprep.subr.mxu0 0.0
    %40 = vmatpush1.msra.mxu0 0.0
    %41 = vmatprep.subr.mxu0 0.0
    %42 = vmatpush1.msra.mxu0 0.0
    %43 = vmatprep.subr.mxu0 0.0
    %44 = vmatpush1.msra.mxu0 0.0
    %45 = vmatprep.subr.mxu0 0.0
    %46 = vmatpush1.msra.mxu0 0.0
    %47 = vmatprep.subr.mxu0 0.0
    %48 = vmatpush1.msra.mxu0 0.0
    %49 = vmatprep.subr.mxu0 0.0
    %50 = vmatpush1.msra.mxu0 0.0
    %51 = vmatprep.subr.mxu0 0.0
    %52 = vmatpush1.msra.mxu0 0.0
    %53 = vmatprep.subr.mxu0 0.0
    %54 = vmatpush1.msra.mxu0 0.0
    %55 = vmatprep.subr.mxu0 0.0
    %56 = vmatpush1.msra.mxu0 0.0
    %57 = vmatprep.subr.mxu0 0.0
    %58 = vmatpush1.msra.mxu0 0.0
    %59 = vmatprep.subr.mxu0 0.0
    %60 = vmatpush1.msra.mxu0 0.0
    %61 = vmatprep.subr.mxu0 0.0
    %62 = vmatpush1.msra.mxu0 0.0
    %63 = vmatprep.subr.mxu0 0.0
    %64 = vmatpush1.msra.mxu0 0.0
    %65 = vmatprep.subr.mxu0 0.0
    %66 = vmatpush1.msra.mxu0 0.0
    %67 = vmatprep.subr.mxu0 0.0
    %68 = vmatpush1.msra.mxu0 0.0
    %69 = vmatprep.subr.mxu0 0.0
    %70 = vmatpush1.msra.mxu0 0.0
    %71 = vmatprep.subr.mxu0 0.0
    %72 = vmatpush1.msra.mxu0 0.0
    %73 = vmatprep.subr.mxu0 0.0
    %74 = vmatpush1.msra.mxu0 0.0
    %75 = vmatprep.subr.mxu0 0.0
    %76 = vmatpush1.msra.mxu0 0.0
    %77 = vmatprep.subr.mxu0 0.0
    %78 = vmatpush1.msra.mxu0 0.0
    %79 = vmatprep.subr.mxu0 0.0
    %80 = vmatpush1.msra.mxu0 0.0
    %81 = vmatprep.subr.mxu0 0.0
    %82 = vmatpush1.msra.mxu0 0.0
    %83 = vmatprep.subr.mxu0 0.0
    %84 = vmatpush1.msra.mxu0 0.0
    %85 = vmatprep.subr.mxu0 0.0
    %86 = vmatpush1.msra.mxu0 0.0
    %87 = vmatprep.subr.mxu0 0.0
    %88 = vmatpush1.msra.mxu0 0.0
    %89 = vmatprep.subr.mxu0 0.0
    %90 = vmatpush1.msra.mxu0 0.0
    %91 = vmatprep.subr.mxu0 0.0
    %92 = vmatpush1.msra.mxu0 0.0
    %93 = vmatprep.mubr.f32.mxu0 0.0
    %94 = vmatmul.mubr.f32.gmra.mrb[0].mxu0 %v24
    %v95 = vpop.f32.mrb[0].mxu0
    %v96 = vadd.f32 0.0, %v95
    %v97 = vpop.f32.mrb[0].mxu0
    %98 = vmatprep.mubr.f32.mxu0 0.0
    %99 = vmatmul.mubr.f32.gmra.mrb[0].mxu0 %v27
    %v100 = vpop.f32.mrb[0].mxu0
    %v101 = vadd.f32 0.0, %v100
    %v102 = vpop.f32.mrb[0].mxu0
    %103 = vdwg.mxu0
    %v104 = vld [vmem:[%s2] sm:$0xff]
    %v105 = vld [vmem:[%s3] sm:$0x1]
    %v107 = vlaneseq
    %v108 = vshrl.u32 %v107, 7
    %v109 = vsub.s32 0, %v108
    %v110 = vrot.slane %v105, %v109
    %vm112 = vcmask 64512
    %v114 = vsel %vm112, %v96, 0
    %v117 = vsel %vm112, %v101, 0
    %119 = vmatprep.subr.mxu0 0.0
    %120 = vmatpush1.msra.mxu0 %v104
    %121 = vmatprep.subr.mxu0 0.0
    %122 = vmatpush1.msra.mxu0 0.0
    %123 = vmatprep.subr.mxu0 0.0
    %124 = vmatpush1.msra.mxu0 0.0
    %125 = vmatprep.subr.mxu0 0.0
    %126 = vmatpush1.msra.mxu0 0.0
    %127 = vmatprep.subr.mxu0 0.0
    %128 = vmatpush1.msra.mxu0 0.0
    %129 = vmatprep.subr.mxu0 0.0
    %130 = vmatpush1.msra.mxu0 0.0
    %131 = vmatprep.subr.mxu0 0.0
    %132 = vmatpush1.msra.mxu0 0.0
    %133 = vmatprep.subr.mxu0 0.0
    %134 = vmatpush1.msra.mxu0 0.0
    %135 = vmatprep.subr.mxu0 0.0
    %136 = vmatpush1.msra.mxu0 0.0
    %137 = vmatprep.subr.mxu0 0.0
    %138 = vmatpush1.msra.mxu0 0.0
    %139 = vmatprep.subr.mxu0 0.0
    %140 = vmatpush1.msra.mxu0 0.0
    %141 = vmatprep.subr.mxu0 0.0
    %142 = vmatpush1.msra.mxu0 0.0
    %143 = vmatprep.subr.mxu0 0.0
    %144 = vmatpush1.msra.mxu0 0.0
    %145 = vmatprep.subr.mxu0 0.0
    %146 = vmatpush1.msra.mxu0 0.0
    %147 = vmatprep.subr.mxu0 0.0
    %148 = vmatpush1.msra.mxu0 0.0
    %149 = vmatprep.subr.mxu0 0.0
    %150 = vmatpush1.msra.mxu0 0.0
    %151 = vmatprep.subr.mxu0 0.0
    %152 = vmatpush1.msra.mxu0 0.0
    %153 = vmatprep.subr.mxu0 0.0
    %154 = vmatpush1.msra.mxu0 0.0
    %155 = vmatprep.subr.mxu0 0.0
    %156 = vmatpush1.msra.mxu0 0.0
    %157 = vmatprep.subr.mxu0 0.0
    %158 = vmatpush1.msra.mxu0 0.0
    %159 = vmatprep.subr.mxu0 0.0
    %160 = vmatpush1.msra.mxu0 0.0
    %161 = vmatprep.subr.mxu0 0.0
    %162 = vmatpush1.msra.mxu0 0.0
    %163 = vmatprep.subr.mxu0 0.0
    %164 = vmatpush1.msra.mxu0 0.0
    %165 = vmatprep.subr.mxu0 0.0
    %166 = vmatpush1.msra.mxu0 0.0
    %167 = vmatprep.subr.mxu0 0.0
    %168 = vmatpush1.msra.mxu0 0.0
    %169 = vmatprep.subr.mxu0 0.0
    %170 = vmatpush1.msra.mxu0 0.0
    %171 = vmatprep.subr.mxu0 0.0
    %172 = vmatpush1.msra.mxu0 0.0
    %173 = vmatprep.subr.mxu0 0.0
    %174 = vmatpush1.msra.mxu0 0.0
    %175 = vmatprep.subr.mxu0 0.0
    %176 = vmatpush1.msra.mxu0 0.0
    %177 = vmatprep.subr.mxu0 0.0
    %178 = vmatpush1.msra.mxu0 0.0
    %179 = vmatprep.subr.mxu0 0.0
    %180 = vmatpush1.msra.mxu0 0.0
    %181 = vmatprep.subr.mxu0 0.0
    %182 = vmatpush1.msra.mxu0 0.0
    %183 = vmatprep.mubr.f32.mxu0 0.0
    %184 = vmatmul.mubr.f32.gmra.mrb[0].mxu0 %v114
    %v185 = vpop.f32.mrb[0].mxu0
    %v186 = vadd.f32 %v110, %v185
    %v187 = vpop.f32.mrb[0].mxu0
    %188 = vmatprep.mubr.f32.mxu0 0.0
    %189 = vmatmul.mubr.f32.gmra.mrb[0].mxu0 %v117
    %v190 = vpop.f32.mrb[0].mxu0
    %v191 = vadd.f32 %v110, %v190
    %v192 = vpop.f32.mrb[0].mxu0
    %193 = vdwg.mxu0
    %v194 = vmax.f32 %v186, 0.0
    %v195 = vmax.f32 %v191, 0.0
    %vm196 = vcmask 261120
    %197 = vst.msk [vmem:[#allocation2] sm:$0xff] %vm196, %v194
    %198 = vst.msk [vmem:[#allocation2 + $0x8] sm:$0xff] %vm196, %v195
    // Predicated region
    $region18: #{tpu_custom_call.1} parent=1 // pred_check
      _
    $region19: #{tpu_custom_call.1} parent=1 // pred_check_branch
      %200 = sbr.rel (0) target = $region21
    $region20: #{tpu_custom_call.1} parent=1 // pred_region
      %s202 = ssub.s32 256, 256
      %203 = vsyncadd [#allocation3], %s202
      %s204 = sshll.u32 [#allocation2], 4
      %s205 = int_to_ptr.vmem [resolvable:$true] %s204
      %210 = dma.vmem_to_hbm [thread:$0]  %s205, 256, %s4, [#allocation3], 128, 128, 8
    $region21: #{tpu_custom_call.1} parent=1 // pred_fallthru
      _
    // Predicated region
    $region22: #{tpu_custom_call.1} parent=1 // pred_check
      _
    $region23: #{tpu_custom_call.1} parent=1 // pred_check_branch
      %212 = sbr.rel (0) target = $region25
    $region24: #{tpu_custom_call.1} parent=1 // pred_region
      %213 = dma.done [#allocation3], 256
    $region25: #{tpu_custom_call.1} parent=1 // pred_fallthru
      _
    %214 = vsyncpa [#allocation3], 1

</llo_original>
